<compile_context>
chip_gen: v6e
topology: v6e:2x2x1
jax: 0.10.0
libtpu: 0.0.40
codegen_flags: <defaults>
</compile_context>

<pallas_src>
import math

import jax
import jax.numpy as jnp
from jax.experimental import pallas as pl
from jax.experimental.pallas import tpu as pltpu

_EPS = 1e-5


# ----------------------------------------------------------------------------
# helpers
# ----------------------------------------------------------------------------
def _round_up(a, m):
    return ((a + m - 1) // m) * m


def _cdiv(a, b):
    return -(-a // b)


def _vmem_capacity_bytes():
    """Physical VMEM capacity (per core); conservative fallback = v7x 64 MiB."""
    try:
        cap = int(pltpu.get_tpu_info().vmem_capacity_bytes)
        if cap > 0:
            return cap
    except Exception:
        pass
    return 64 * 1024 * 1024


def _pick_row_tile(r, d, itemsize, vmem_cap):
    """Byte-targeted row tile for the two-pass kernels.

    * ~4 MiB x-blocks (2x the previous 2 MiB cap): at v7x's ~3.2 TB/s per-TC
      HBM that is ~1.3 us of DMA per step vs ~0.35 us fixed per-step
      overhead, and >= 85% of the measured HBM roofline on v5e/v6e.  The cap
      is bounded by VMEM: the stats kernel keeps ~4 block-sized f32
      temporaries live on top of the double-buffered input (~6x block total),
      which must stay well under the scoped limit (48 MiB of v7x's 64 MiB).
    * >= 4 grid steps whenever R allows: the "parallel" grid axis is sharded
      across v7x's two TensorCores, so 4 steps keeps >= 2 steps per core and
      preserves DMA/compute overlap inside each core (harmless on 1-TC parts).
    """
    row_bytes = d * max(int(itemsize), 4)            # kernels upcast to f32
    budget = max(512 * 1024, min(4 * 1024 * 1024, vmem_cap // 12))
    tr = max(8, (budget // row_bytes) // 8 * 8)
    if r > 8:
        tr = min(tr, _round_up(_cdiv(r, 4), 8))      # >= 4 grid steps
    tr = min(tr, _round_up(r, 8))
    return int(tr)


# ----------------------------------------------------------------------------
# kernels
# ----------------------------------------------------------------------------
def _fused_kernel(x_ref, o_ref):
    """Small-tensor path: stats + global branch + normalize in ONE kernel.

    Only runs on small tensors (fixed overheads dominate), so it keeps the
    simple, proven VPU `jnp.sum` reductions.
    """
    x = x_ref[...].astype(jnp.float32)                    # (R, D)
    r, d = x.shape
    d_f = float(d)
    numel = float(r) * d_f

    mu = jnp.sum(x, axis=-1, keepdims=True) * (1.0 / d_f)  # (R, 1)
    xc = x - mu
    xa = jnp.abs(xc)
    lt1 = (xa <= 1.0).astype(jnp.float32)
    xc2 = xc * xc

    sumsq = jnp.sum(xc2, axis=-1, keepdims=True)
    sumabs = jnp.sum(xa, axis=-1, keepdims=True)
    cnt = jnp.sum(lt1, axis=-1, keepdims=True)             # integer-valued f32
    sumsq_lt = jnp.sum(lt1 * xc2, axis=-1, keepdims=True)
    sumabs_lt = jnp.sum(lt1 * xa, axis=-1, keepdims=True)

    # Global branch resolution — EXACT: per-row counts are integer-valued f32
    # (d < 2^24), so min/max comparisons cannot misround.
    cnt_min = jnp.min(cnt, axis=0, keepdims=True)           # (1, 1)
    cnt_max = jnp.max(cnt, axis=0, keepdims=True)
    lt1_num = jnp.sum(cnt, axis=0, keepdims=True)
    w_all = (cnt_min >= d_f).astype(jnp.float32)              # all |xc| <= 1
    w_none = (cnt_max <= 0.0).astype(jnp.float32) * (1.0 - w_all)
    w_mix = 1.0 - w_all - w_none

    std_all = jnp.sqrt(sumsq * (1.0 / d_f) + _EPS)
    std_none = sumabs * (1.0 / d_f)
    # divisor guards only matter for the unselected (weight 0) branches
    std_mix = (jnp.sqrt(sumsq_lt) / jnp.sqrt(jnp.maximum(lt1_num, 1.0))
               + (sumabs - sumabs_lt) / jnp.maximum(numel - lt1_num, 1.0))
    # NOTE: like the PyTorch module, the mixed/none branches carry no eps, so
    # an all-zero centered row in a mixed tensor yields inf/NaN (inherited
    # semantics, not a kernel bug).
    x_std = w_all * std_all + w_none * std_none + w_mix * std_mix

    inv_std = 1.0 / x_std                       # O(R) exact divides ...
    o_ref[...] = (xc * inv_std).astype(o_ref.dtype)   # ... O(R*D) multiplies


def _stats_kernel(x_ref, s_ref):
    """Per-row reductions over D, packed into ONE (tr, 8) f32 output block.

    lanes: [sum(x), sum(xc^2), sum|xc|, count(|xc|<=1),
            sum(lt1*xc^2), sum(lt1*|xc|), 0, 0]

    All row reductions run on the MXU (otherwise idle here) as dots against
    per-lane selector columns, so the VPU only does the ~6 elementwise ops per
    element and the result arrives lane-packed for a single dense store.
    """
    x = x_ref[...].astype(jnp.float32)                    # (tr, D)
    d = x.shape[-1]
    d_f = float(d)

    lane = jax.lax.broadcasted_iota(jnp.int32, (d, 8), 1)

    def rsum_into(t, c):
        # Row-sum of t on the MXU; the result lands in lane c of a (tr, 8)
        # block (other lanes are exactly zero).
        sel = (lane == c).astype(jnp.float32)
        return jnp.dot(t, sel, preferred_element_type=jnp.float32)

    s0 = rsum_into(x, 0)                                  # lane 0 = sum(x)
    mu = s0[:, 0:1] * (1.0 / d_f)                          # (tr, 1)
    xc = x - mu
    xa = jnp.abs(xc)
    lt1 = (xa <= 1.0).astype(jnp.float32)
    xc2 = xc * xc

    packed = (s0
              + rsum_into(xc2, 1)
              + rsum_into(xa, 2)
              + rsum_into(lt1, 3)
              + rsum_into(lt1 * xc2, 4)
              + rsum_into(lt1 * xa, 5))
    s_ref[...] = packed                                    # one dense store


def _normalize_kernel(x_ref, s_ref, g_ref, o_ref):
    """out = (x - mean) * inv_std.

    s holds the per-row packed sums from pass 1; g holds the 4 global scalars
    (branch weights + mixed-branch divisors) resolved by the tiny XLA glue, so
    the whole std computation happens per-row in-kernel (no params array).
    """
    x = x_ref[...].astype(jnp.float32)                    # (tr, D)
    d_f = float(x.shape[-1])

    mu = s_ref[:, 0:1] * (1.0 / d_f)
    sumsq = s_ref[:, 1:2]
    sumabs = s_ref[:, 2:3]
    sumsq_lt = s_ref[:, 4:5]
    sumabs_lt = s_ref[:, 5:6]

    w_all = g_ref[:, 0:1]              # (1, 1), broadcasts against (tr, 1)
    w_none = g_ref[:, 1:2]
    inv_sqrt_lt1 = g_ref[:, 2:3]
    inv_gt1_den = g_ref[:, 3:4]

    std_all = jnp.sqrt(sumsq * (1.0 / d_f) + _EPS)
    std_none = sumabs * (1.0 / d_f)
    std_mix = jnp.sqrt(sumsq_lt) * inv_sqrt_lt1 + (sumabs - sumabs_lt) * inv_gt1_den
    w_mix = 1.0 - w_all - w_none
    x_std = w_all * std_all + w_none * std_none + w_mix * std_mix

    inv_std = 1.0 / x_std                           # divide once per row
    o_ref[...] = ((x - mu) * inv_std).astype(o_ref.dtype)


# ----------------------------------------------------------------------------
# wrapper
# ----------------------------------------------------------------------------
def huber_layer_norm(x, layer_dim=-1, *, max_fused_bytes=None):
    orig_shape = x.shape
    nd = x.ndim
    ld = layer_dim % nd

    xm = x if ld == nd - 1 else jnp.moveaxis(x, ld, -1)
    moved_shape = xm.shape
    d = int(moved_shape[-1])
    r = int(math.prod(moved_shape[:-1])) if nd > 1 else 1
    x2 = xm.reshape(r, d)

    vmem_cap = _vmem_capacity_bytes()
    vmem_limit = int(min(vmem_cap * 3 // 4, 128 * 1024 * 1024))

    def _unmove(out2):
        out = out2.reshape(moved_shape)
        out = out if ld == nd - 1 else jnp.moveaxis(out, -1, ld)
        return out.reshape(orig_shape)

    # ---------------- fused single-call path (small tensors) ----------------
    if max_fused_bytes is None:
        if vmem_cap <= 64 * 1024 * 1024:
            # v7x-class (64 MiB VMEM, 2 TCs): grid=(1,) fused has no overlap
            # and cannot use the second core -> prefer the two-pass path early.
            max_fused_bytes = 3 * 512 * 1024            # 1.5 MiB
        else:
            # single-TC 128 MiB-VMEM parts (v5e/v6e): fused saves a full
            # second HBM read of x + dispatches; ~6x f32 temporaries still fit.
            max_fused_bytes = 8 * 1024 * 1024
    if r * d * 4 <= max_fused_bytes:
        out2 = pl.pallas_call(
            _fused_kernel,
            out_shape=jax.ShapeDtypeStruct((r, d), x.dtype),
            grid=(1,),
            in_specs=[pl.BlockSpec((r, d), lambda i: (0, 0))],
            out_specs=pl.BlockSpec((r, d), lambda i: (0, 0)),
            compiler_params=pltpu.CompilerParams(
                dimension_semantics=("arbitrary",),
                vmem_limit_bytes=vmem_limit),
        )(x2)
        return _unmove(out2)

    # ---------------- two-pass path (large tensors) ----------------
    itemsize = jnp.dtype(x.dtype).itemsize
    tr = _pick_row_tile(r, d, itemsize, vmem_cap)
    grid = (_cdiv(r, tr),)          # no host-side padding: partial last block
                                    # is masked by Pallas on store, so garbage
                                    # rows never reach the outputs below.

    cparams = pltpu.CompilerParams(
        dimension_semantics=("parallel",),        # shards across TCs on v7x
        vmem_limit_bytes=vmem_limit)

    # pass 1: per-row reductions (MXU), one packed lane-dense output stream
    stats = pl.pallas_call(
        _stats_kernel,
        out_shape=jax.ShapeDtypeStruct((r, 8), jnp.float32),
        grid=grid,
        in_specs=[pl.BlockSpec((tr, d), lambda i: (i, 0))],
        out_specs=pl.BlockSpec((tr, 8), lambda i: (i, 0)),
        compiler_params=cparams,
    )(x2)

    # ---- tiny O(1)-output glue: resolve the global data-dependent branch ----
    # Branch resolution is EXACT: per-row counts stay integer-valued f32
    # through the MXU, so min/max comparisons cannot misround.  The global
    # count sum is only used as a (reciprocal) divisor for the mixed branch,
    # where f32 rounding error is immaterial.
    cnt = stats[:, 3]
    d_f = float(d)
    numel = float(r) * d_f
    all_lt1 = jnp.min(cnt) >= d_f
    none_lt1 = jnp.max(cnt) <= 0.0
    lt1_num = jnp.sum(cnt)

    w_all = all_lt1.astype(jnp.float32)
    w_none = (none_lt1 & (~all_lt1)).astype(jnp.float32)
    inv_sqrt_lt1 = jax.lax.rsqrt(jnp.maximum(lt1_num, 1.0))
    inv_gt1_den = 1.0 / jnp.maximum(numel - lt1_num, 1.0)
    zero = jnp.zeros((), jnp.float32)
    gparams = jnp.stack([w_all, w_none, inv_sqrt_lt1, inv_gt1_den,
                         zero, zero, zero, zero]).reshape(1, 8)

    # pass 2: per-row std + normalize in-kernel (glue folded in; no params
    # array / extra HBM round trip)
    out2 = pl.pallas_call(
        _normalize_kernel,
        out_shape=jax.ShapeDtypeStruct((r, d), x.dtype),
        grid=grid,
        in_specs=[pl.BlockSpec((tr, d), lambda i: (i, 0)),
                  pl.BlockSpec((tr, 8), lambda i: (i, 0)),
                  pl.BlockSpec((1, 8), lambda i: (0, 0))],
        out_specs=pl.BlockSpec((tr, d), lambda i: (i, 0)),
        compiler_params=cparams,
    )(x2, stats, gparams)

    return _unmove(out2)


# ----------------------------------------------------------------------------
# pure-JAX reference (replicates the PyTorch forward semantics)
# ----------------------------------------------------------------------------
def _reference(x, layer_dim=-1):
    x = x - jnp.mean(x, axis=layer_dim, keepdims=True)
    xa = jnp.abs(x)
    lt1 = (xa <= 1.0).astype(x.dtype)
    lt1_num = jnp.sum(lt1)
    numel = float(x.size)
    std_all = jnp.sqrt(jnp.mean(x * x, axis=layer_dim, keepdims=True) + _EPS)
    std_none = jnp.mean(xa, axis=layer_dim, keepdims=True)
    std_mix = (jnp.sqrt(jnp.sum((lt1 * x) ** 2, axis=layer_dim, keepdims=True))
               / jnp.sqrt(jnp.maximum(lt1_num, 1.0))
               + jnp.sum((1.0 - lt1) * xa, axis=layer_dim, keepdims=True)
               / jnp.maximum(numel - lt1_num, 1.0))
    x_std = jnp.where(lt1_num >= numel, std_all,
                      jnp.where(lt1_num <= 0, std_none, std_mix))
    return x / x_std


if __name__ == "__main__":
    hln = jax.jit(huber_layer_norm,
                  static_argnames=("layer_dim", "max_fused_bytes"))

    # Tolerance leaves margin for MXU f32-matmul precision differences across
    # TPU generations while still catching any structural error.
    def _check(x, **kw):
        out = jax.block_until_ready(hln(x, **kw))
        ref = _reference(x)
        assert out.shape == x.shape and out.dtype == x.dtype
        assert bool(jnp.allclose(out, ref, rtol=5e-3, atol=2e-3)), "mismatch"

    # NCHW input, normalize over the last axis (PyTorch default layer_dim=-1).
    x = jax.random.normal(jax.random.PRNGKey(0), (2, 4, 16, 16),
                          dtype=jnp.float32)                    # mixed branch
    _check(x)                         # fused path
    _check(x, max_fused_bytes=0)      # forced two-pass (MXU stats + fused glue)

    # two-pass with R not divisible by the row tile (partial last block, no pad)
    x_rag = 3.0 * jax.random.normal(jax.random.PRNGKey(1), (3, 5, 16),
                                    dtype=jnp.float32)
    _check(x_rag, max_fused_bytes=0)

    # two-pass with D a multiple of 128 (fully lane-dense blocks)
    x_wide = jax.random.normal(jax.random.PRNGKey(2), (64, 256),
                               dtype=jnp.float32)
    _check(x_wide, max_fused_bytes=0)

    # "all |xc| <= 1" branch (small-magnitude data), fused and two-pass
    x_all = 0.05 * jax.random.normal(jax.random.PRNGKey(3), (2, 4, 8, 32),
                                     dtype=jnp.float32)
    _check(x_all)
    _check(x_all, max_fused_bytes=0)

    # "none <= 1" branch (zero-mean rows with |xc| = 5 everywhere)
    sign = jnp.where((jnp.arange(16) % 2) == 0, 1.0, -1.0).astype(jnp.float32)
    x_none = 5.0 * jnp.broadcast_to(sign, (2, 8, 16))
    _check(x_none)
    _check(x_none, max_fused_bytes=0)

    print("KERNEL_OK")
</pallas_src>

<mosaic_0001>
module attributes {stable_mosaic.version = 11 : i64} {
  func.func @_fused_kernel(%arg0: i32, %arg1: memref<128x16xf32, #tpu.memory_space<vmem>>, %arg2: memref<128x16xf32, #tpu.memory_space<vmem>>) attributes {dimension_semantics = [#tpu.dimension_semantics<arbitrary>], iteration_bounds = array<i64: 1>, scalar_prefetch = 0 : i64, scratch_operands = 0 : i64, tpu.core_type = #tpu.core_type<tc>, window_params = [{pipeline_mode = #tpu.pipeline_mode<synchronous>, transform_indices = @transform_0, window_bounds = array<i64: 128, 16>}, {pipeline_mode = #tpu.pipeline_mode<synchronous>, transform_indices = @transform_1, window_bounds = array<i64: 128, 16>}]} {
    %c0 = arith.constant 0 : index
    %c0_0 = arith.constant 0 : index
    %0 = vector.load %arg1[%c0, %c0_0] : memref<128x16xf32, #tpu.memory_space<vmem>>, vector<128x16xf32>
    %cst = arith.constant dense<0.000000e+00> : vector<128xf32>
    %1 = vector.multi_reduction <add>, %0, %cst [1] : vector<128x16xf32> to vector<128xf32>
    %2 = vector.shape_cast %1 : vector<128xf32> to vector<128x1xf32>
    %cst_1 = arith.constant 6.250000e-02 : f32
    %3 = vector.broadcast %cst_1 : f32 to vector<128x1xf32>
    %4 = arith.mulf %2, %3 : vector<128x1xf32>
    %5 = vector.broadcast %4 : vector<128x1xf32> to vector<128x16xf32>
    %6 = arith.subf %0, %5 : vector<128x16xf32>
    %7 = math.absf %6 : vector<128x16xf32>
    %cst_2 = arith.constant 1.000000e+00 : f32
    %8 = vector.broadcast %cst_2 : f32 to vector<128x16xf32>
    %9 = arith.cmpf ole, %7, %8 : vector<128x16xf32>
    %10 = arith.extui %9 : vector<128x16xi1> to vector<128x16xi32>
    %11 = arith.sitofp %10 : vector<128x16xi32> to vector<128x16xf32>
    %12 = arith.mulf %6, %6 : vector<128x16xf32>
    %cst_3 = arith.constant dense<0.000000e+00> : vector<128xf32>
    %13 = vector.multi_reduction <add>, %12, %cst_3 [1] : vector<128x16xf32> to vector<128xf32>
    %14 = vector.shape_cast %13 : vector<128xf32> to vector<128x1xf32>
    %cst_4 = arith.constant dense<0.000000e+00> : vector<128xf32>
    %15 = vector.multi_reduction <add>, %7, %cst_4 [1] : vector<128x16xf32> to vector<128xf32>
    %16 = vector.shape_cast %15 : vector<128xf32> to vector<128x1xf32>
    %cst_5 = arith.constant dense<0.000000e+00> : vector<128xf32>
    %17 = vector.multi_reduction <add>, %11, %cst_5 [1] : vector<128x16xf32> to vector<128xf32>
    %18 = vector.shape_cast %17 : vector<128xf32> to vector<128x1xf32>
    %19 = arith.mulf %11, %12 : vector<128x16xf32>
    %cst_6 = arith.constant dense<0.000000e+00> : vector<128xf32>
    %20 = vector.multi_reduction <add>, %19, %cst_6 [1] : vector<128x16xf32> to vector<128xf32>
    %21 = vector.shape_cast %20 : vector<128xf32> to vector<128x1xf32>
    %22 = arith.mulf %11, %7 : vector<128x16xf32>
    %cst_7 = arith.constant dense<0.000000e+00> : vector<128xf32>
    %23 = vector.multi_reduction <add>, %22, %cst_7 [1] : vector<128x16xf32> to vector<128xf32>
    %24 = vector.shape_cast %23 : vector<128xf32> to vector<128x1xf32>
    %cst_8 = arith.constant dense<0x7F800000> : vector<1xf32>
    %25 = vector.multi_reduction <minimumf>, %18, %cst_8 [0] : vector<128x1xf32> to vector<1xf32>
    %26 = vector.shape_cast %25 : vector<1xf32> to vector<1x1xf32>
    %cst_9 = arith.constant dense<0xFF800000> : vector<1xf32>
    %27 = vector.multi_reduction <maximumf>, %18, %cst_9 [0] : vector<128x1xf32> to vector<1xf32>
    %28 = vector.shape_cast %27 : vector<1xf32> to vector<1x1xf32>
    %cst_10 = arith.constant dense<0.000000e+00> : vector<1xf32>
    %29 = vector.multi_reduction <add>, %18, %cst_10 [0] : vector<128x1xf32> to vector<1xf32>
    %30 = vector.shape_cast %29 : vector<1xf32> to vector<1x1xf32>
    %cst_11 = arith.constant 1.600000e+01 : f32
    %31 = vector.broadcast %cst_11 : f32 to vector<1x1xf32>
    %32 = arith.cmpf oge, %26, %31 : vector<1x1xf32>
    %33 = arith.extui %32 : vector<1x1xi1> to vector<1x1xi32>
    %34 = arith.sitofp %33 : vector<1x1xi32> to vector<1x1xf32>
    %cst_12 = arith.constant 0.000000e+00 : f32
    %35 = vector.broadcast %cst_12 : f32 to vector<1x1xf32>
    %36 = arith.cmpf ole, %28, %35 : vector<1x1xf32>
    %37 = arith.extui %36 : vector<1x1xi1> to vector<1x1xi32>
    %38 = arith.sitofp %37 : vector<1x1xi32> to vector<1x1xf32>
    %cst_13 = arith.constant 1.000000e+00 : f32
    %39 = vector.broadcast %cst_13 : f32 to vector<1x1xf32>
    %40 = arith.subf %39, %34 : vector<1x1xf32>
    %41 = arith.mulf %38, %40 : vector<1x1xf32>
    %cst_14 = arith.constant 1.000000e+00 : f32
    %42 = vector.broadcast %cst_14 : f32 to vector<1x1xf32>
    %43 = arith.subf %42, %34 : vector<1x1xf32>
    %44 = arith.subf %43, %41 : vector<1x1xf32>
    %cst_15 = arith.constant 6.250000e-02 : f32
    %45 = vector.broadcast %cst_15 : f32 to vector<128x1xf32>
    %46 = arith.mulf %14, %45 : vector<128x1xf32>
    %cst_16 = arith.constant 9.99999974E-6 : f32
    %47 = vector.broadcast %cst_16 : f32 to vector<128x1xf32>
    %48 = arith.addf %46, %47 : vector<128x1xf32>
    %49 = math.sqrt %48 : vector<128x1xf32>
    %cst_17 = arith.constant 6.250000e-02 : f32
    %50 = vector.broadcast %cst_17 : f32 to vector<128x1xf32>
    %51 = arith.mulf %16, %50 : vector<128x1xf32>
    %52 = math.sqrt %21 : vector<128x1xf32>
    %cst_18 = arith.constant 1.000000e+00 : f32
    %53 = vector.broadcast %cst_18 : f32 to vector<1x1xf32>
    %54 = arith.maximumf %30, %53 : vector<1x1xf32>
    %55 = math.sqrt %54 : vector<1x1xf32>
    %56 = vector.broadcast %55 : vector<1x1xf32> to vector<128x1xf32>
    %57 = arith.divf %52, %56 : vector<128x1xf32>
    %58 = arith.subf %16, %24 : vector<128x1xf32>
    %cst_19 = arith.constant 2.048000e+03 : f32
    %59 = vector.broadcast %cst_19 : f32 to vector<1x1xf32>
    %60 = arith.subf %59, %30 : vector<1x1xf32>
    %cst_20 = arith.constant 1.000000e+00 : f32
    %61 = vector.broadcast %cst_20 : f32 to vector<1x1xf32>
    %62 = arith.maximumf %60, %61 : vector<1x1xf32>
    %63 = vector.broadcast %62 : vector<1x1xf32> to vector<128x1xf32>
    %64 = arith.divf %58, %63 : vector<128x1xf32>
    %65 = arith.addf %57, %64 : vector<128x1xf32>
    %66 = vector.broadcast %34 : vector<1x1xf32> to vector<128x1xf32>
    %67 = arith.mulf %66, %49 : vector<128x1xf32>
    %68 = vector.broadcast %41 : vector<1x1xf32> to vector<128x1xf32>
    %69 = arith.mulf %68, %51 : vector<128x1xf32>
    %70 = arith.addf %67, %69 : vector<128x1xf32>
    %71 = vector.broadcast %44 : vector<1x1xf32> to vector<128x1xf32>
    %72 = arith.mulf %71, %65 : vector<128x1xf32>
    %73 = arith.addf %70, %72 : vector<128x1xf32>
    %cst_21 = arith.constant 1.000000e+00 : f32
    %74 = vector.broadcast %cst_21 : f32 to vector<128x1xf32>
    %75 = arith.divf %74, %73 : vector<128x1xf32>
    %76 = vector.broadcast %75 : vector<128x1xf32> to vector<128x16xf32>
    %77 = arith.mulf %6, %76 : vector<128x16xf32>
    %c0_22 = arith.constant 0 : index
    %c0_23 = arith.constant 0 : index
    %78 = vector.load %arg2[%c0_22, %c0_23] : memref<128x16xf32, #tpu.memory_space<vmem>>, vector<128x16xf32>
    tpu.vector_store %arg2[%c0_22, %c0_23], %77 {strides = array<i32>} : memref<128x16xf32, #tpu.memory_space<vmem>>, vector<128x16xf32>,
    return
  }
  func.func @transform_0(%arg0: i32) -> (i32, i32) {
    %c0_i32 = arith.constant 0 : i32
    %c0_i32_0 = arith.constant 0 : i32
    %c0_i32_1 = arith.constant 0 : i32
    return %c0_i32, %c0_i32_0 : i32, i32
  }
  func.func @transform_1(%arg0: i32) -> (i32, i32) {
    %c0_i32 = arith.constant 0 : i32
    %c0_i32_0 = arith.constant 0 : i32
    %c0_i32_1 = arith.constant 0 : i32
    return %c0_i32, %c0_i32_0 : i32, i32
  }
}

</mosaic_0001>

<llo_original>
// kernel: huber_layer_norm.1
$region0: #{huber_layer_norm.1}
  #allocation0 [shape = 'u32[]', space=smem, size = 0x4, offset = 0x4, fixed_abs, tag = 'smem constant byte address 0x4 - core index']
  #allocation1 [shape = 'u32[144,128]{1,0:T(1,128)}', space=vmem, size = 0x12000, scoped, tag = 'internal scratch']
  %s0 = inlined_call_operand.hbm [shape: f32[128,16], index: 0, kind: input, shape index: {}]
  %s1 = inlined_call_operand.hbm [shape: f32[128,16], index: 1, kind: output, shape index: {}]
  %s2 = sld [smem:[#allocation0]]
  $region18: #{huber_layer_norm.1} parent=0
    _
  %s4 = ssub.s32 1, %s2
  %s5 = scalar_select 0, %s4, %s2
  $region1: #{huber_layer_norm.1} parent=0
    #allocation2 [shape = 'u8[65536]{0}', space=vmem, size = 0x10000, scoped, tag = 'input window, operand 0, single buffered']
    #allocation3 [shape = 's32[1]{0}', space=sflag, size = 0x4, scoped, tag = 'scoped memory for huber_layer_norm.1']
    #allocation4 [shape = 's32[1]{0}', space=sflag, size = 0x4, scoped, tag = 'scoped memory for huber_layer_norm.1']
    #allocation5 [shape = 'u8[65536]{0}', space=vmem, size = 0x10000, scoped, tag = 'output window, operand 0, single buffered']
    %6 = vsyncpa [#allocation3], 0
    %7 = vsyncpa [#allocation4], 0
    // Predicated region
    $region2: #{huber_layer_norm.1} parent=1 // pred_check
      _
    $region3: #{huber_layer_norm.1} parent=1 // pred_check_branch
      %9 = sbr.rel (0) target = $region5
    $region4: #{huber_layer_norm.1} parent=1 // pred_region
      %s11 = ssub.s32 2048, 2048
      %12 = vsyncadd [#allocation3], %s11
      %s13 = sshll.u32 [#allocation2], 4
      %s14 = int_to_ptr.vmem [resolvable:$true] %s13
      %19 = dma.hbm_to_vmem [thread:$0]  %s0, 2048, %s14, [#allocation3], 128, 128, 8
    $region5: #{huber_layer_norm.1} parent=1 // pred_fallthru
      _
    // Predicated region
    $region6: #{huber_layer_norm.1} parent=1 // pred_check
      _
    $region7: #{huber_layer_norm.1} parent=1 // pred_check_branch
      %21 = sbr.rel (0) target = $region9
    $region8: #{huber_layer_norm.1} parent=1 // pred_region
      %22 = dma.done [#allocation3], 2048
    $region9: #{huber_layer_norm.1} parent=1 // pred_fallthru
      _
    %v23 = vld [vmem:[#allocation2] sm:$0xff]
    %v24 = vld [vmem:[#allocation2 + $0x8] sm:$0xff]
    %v25 = vld [vmem:[#allocation2 + $0x10] sm:$0xff]
    %v26 = vld [vmem:[#allocation2 + $0x18] sm:$0xff]
    %v27 = vld [vmem:[#allocation2 + $0x20] sm:$0xff]
    %v28 = vld [vmem:[#allocation2 + $0x28] sm:$0xff]
    %v29 = vld [vmem:[#allocation2 + $0x30] sm:$0xff]
    %v30 = vld [vmem:[#allocation2 + $0x38] sm:$0xff]
    %v31 = vld [vmem:[#allocation2 + $0x40] sm:$0xff]
    %v32 = vld [vmem:[#allocation2 + $0x48] sm:$0xff]
    %v33 = vld [vmem:[#allocation2 + $0x50] sm:$0xff]
    %v34 = vld [vmem:[#allocation2 + $0x58] sm:$0xff]
    %v35 = vld [vmem:[#allocation2 + $0x60] sm:$0xff]
    %v36 = vld [vmem:[#allocation2 + $0x68] sm:$0xff]
    %v37 = vld [vmem:[#allocation2 + $0x70] sm:$0xff]
    %v38 = vld [vmem:[#allocation2 + $0x78] sm:$0xff]
    %vm39 = vcmask 130048
    %v40 = vsel %vm39, %v23, 0.0
    %41 = vadd.xlane.f32.xlu0 %v40
    %v42 = vpop.xlane.xlu0 %41
    %v43 = vsel %vm39, %v24, 0.0
    %44 = vadd.xlane.f32.xlu0 %v43
    %v45 = vpop.xlane.xlu0 %44
    %v46 = vsel %vm39, %v25, 0.0
    %47 = vadd.xlane.f32.xlu0 %v46
    %v48 = vpop.xlane.xlu0 %47
    %v49 = vsel %vm39, %v26, 0.0
    %50 = vadd.xlane.f32.xlu0 %v49
    %v51 = vpop.xlane.xlu0 %50
    %v52 = vsel %vm39, %v27, 0.0
    %53 = vadd.xlane.f32.xlu0 %v52
    %v54 = vpop.xlane.xlu0 %53
    %v55 = vsel %vm39, %v28, 0.0
    %56 = vadd.xlane.f32.xlu0 %v55
    %v57 = vpop.xlane.xlu0 %56
    %v58 = vsel %vm39, %v29, 0.0
    %59 = vadd.xlane.f32.xlu0 %v58
    %v60 = vpop.xlane.xlu0 %59
    %v61 = vsel %vm39, %v30, 0.0
    %62 = vadd.xlane.f32.xlu0 %v61
    %v63 = vpop.xlane.xlu0 %62
    %v64 = vsel %vm39, %v31, 0.0
    %65 = vadd.xlane.f32.xlu0 %v64
    %v66 = vpop.xlane.xlu0 %65
    %v67 = vsel %vm39, %v32, 0.0
    %68 = vadd.xlane.f32.xlu0 %v67
    %v69 = vpop.xlane.xlu0 %68
    %v70 = vsel %vm39, %v33, 0.0
    %71 = vadd.xlane.f32.xlu0 %v70
    %v72 = vpop.xlane.xlu0 %71
    %v73 = vsel %vm39, %v34, 0.0
    %74 = vadd.xlane.f32.xlu0 %v73
    %v75 = vpop.xlane.xlu0 %74
    %v76 = vsel %vm39, %v35, 0.0
    %77 = vadd.xlane.f32.xlu0 %v76
    %v78 = vpop.xlane.xlu0 %77
    %v79 = vsel %vm39, %v36, 0.0
    %80 = vadd.xlane.f32.xlu0 %v79
    %v81 = vpop.xlane.xlu0 %80
    %v82 = vsel %vm39, %v37, 0.0
    %83 = vadd.xlane.f32.xlu0 %v82
    %v84 = vpop.xlane.xlu0 %83
    %v85 = vsel %vm39, %v38, 0.0
    %86 = vadd.xlane.f32.xlu0 %v85
    %v87 = vpop.xlane.xlu0 %86
    %v88 = vmul.f32 %v42, 0.0625
    %v89 = vmul.f32 %v45, 0.0625
    %v90 = vmul.f32 %v48, 0.0625
    %v91 = vmul.f32 %v51, 0.0625
    %v92 = vmul.f32 %v54, 0.0625
    %v93 = vmul.f32 %v57, 0.0625
    %v94 = vmul.f32 %v60, 0.0625
    %v95 = vmul.f32 %v63, 0.0625
    %v96 = vmul.f32 %v66, 0.0625
    %v97 = vmul.f32 %v69, 0.0625
    %v98 = vmul.f32 %v72, 0.0625
    %v99 = vmul.f32 %v75, 0.0625
    %v100 = vmul.f32 %v78, 0.0625
    %v101 = vmul.f32 %v81, 0.0625
    %v102 = vmul.f32 %v84, 0.0625
    %v103 = vmul.f32 %v87, 0.0625
    %v104 = vsub.f32 %v23, %v88
    %v105 = vsub.f32 %v24, %v89
    %v106 = vsub.f32 %v25, %v90
    %v107 = vsub.f32 %v26, %v91
    %v108 = vsub.f32 %v27, %v92
    %v109 = vsub.f32 %v28, %v93
    %v110 = vsub.f32 %v29, %v94
    %v111 = vsub.f32 %v30, %v95
    %v112 = vsub.f32 %v31, %v96
    %v113 = vsub.f32 %v32, %v97
    %v114 = vsub.f32 %v33, %v98
    %v115 = vsub.f32 %v34, %v99
    %v116 = vsub.f32 %v35, %v100
    %v117 = vsub.f32 %v36, %v101
    %v118 = vsub.f32 %v37, %v102
    %v119 = vsub.f32 %v38, %v103
    %v120 = vand.u32 2147483647, %v104
    %v121 = vand.u32 2147483647, %v105
    %v122 = vand.u32 2147483647, %v106
    %v123 = vand.u32 2147483647, %v107
    %v124 = vand.u32 2147483647, %v108
    %v125 = vand.u32 2147483647, %v109
    %v126 = vand.u32 2147483647, %v110
    %v127 = vand.u32 2147483647, %v111
    %v128 = vand.u32 2147483647, %v112
    %v129 = vand.u32 2147483647, %v113
    %v130 = vand.u32 2147483647, %v114
    %v131 = vand.u32 2147483647, %v115
    %v132 = vand.u32 2147483647, %v116
    %v133 = vand.u32 2147483647, %v117
    %v134 = vand.u32 2147483647, %v118
    %v135 = vand.u32 2147483647, %v119
    %vm136 = vcmp.le.f32.partialorder %v120, 1.0
    %vm137 = vcmp.le.f32.partialorder %v121, 1.0
    %vm138 = vcmp.le.f32.partialorder %v122, 1.0
    %vm139 = vcmp.le.f32.partialorder %v123, 1.0
    %vm140 = vcmp.le.f32.partialorder %v124, 1.0
    %vm141 = vcmp.le.f32.partialorder %v125, 1.0
    %vm142 = vcmp.le.f32.partialorder %v126, 1.0
    %vm143 = vcmp.le.f32.partialorder %v127, 1.0
    %vm144 = vcmp.le.f32.partialorder %v128, 1.0
    %vm145 = vcmp.le.f32.partialorder %v129, 1.0
    %vm146 = vcmp.le.f32.partialorder %v130, 1.0
    %vm147 = vcmp.le.f32.partialorder %v131, 1.0
    %vm148 = vcmp.le.f32.partialorder %v132, 1.0
    %vm149 = vcmp.le.f32.partialorder %v133, 1.0
    %vm150 = vcmp.le.f32.partialorder %v134, 1.0
    %vm151 = vcmp.le.f32.partialorder %v135, 1.0
    %v152 = vsel %vm136, 1, 0
    %v153 = vsel %vm137, 1, 0
    %v154 = vsel %vm138, 1, 0
    %v155 = vsel %vm139, 1, 0
    %v156 = vsel %vm140, 1, 0
    %v157 = vsel %vm141, 1, 0
    %v158 = vsel %vm142, 1, 0
    %v159 = vsel %vm143, 1, 0
    %v160 = vsel %vm144, 1, 0
    %v161 = vsel %vm145, 1, 0
    %v162 = vsel %vm146, 1, 0
    %v163 = vsel %vm147, 1, 0
    %v164 = vsel %vm148, 1, 0
    %v165 = vsel %vm149, 1, 0
    %v166 = vsel %vm150, 1, 0
    %v167 = vsel %vm151, 1, 0
    %v168 = vcvt.s32.f32 %v152
    %v169 = vcvt.s32.f32 %v153
    %v170 = vcvt.s32.f32 %v154
    %v171 = vcvt.s32.f32 %v155
    %v172 = vcvt.s32.f32 %v156
    %v173 = vcvt.s32.f32 %v157
    %v174 = vcvt.s32.f32 %v158
    %v175 = vcvt.s32.f32 %v159
    %v176 = vcvt.s32.f32 %v160
    %v177 = vcvt.s32.f32 %v161
    %v178 = vcvt.s32.f32 %v162
    %v179 = vcvt.s32.f32 %v163
    %v180 = vcvt.s32.f32 %v164
    %v181 = vcvt.s32.f32 %v165
    %v182 = vcvt.s32.f32 %v166
    %v183 = vcvt.s32.f32 %v167
    %v184 = vmul.f32 %v104, %v104
    %v185 = vmul.f32 %v105, %v105
    %v186 = vmul.f32 %v106, %v106
    %v187 = vmul.f32 %v107, %v107
    %v188 = vmul.f32 %v108, %v108
    %v189 = vmul.f32 %v109, %v109
    %v190 = vmul.f32 %v110, %v110
    %v191 = vmul.f32 %v111, %v111
    %v192 = vmul.f32 %v112, %v112
    %v193 = vmul.f32 %v113, %v113
    %v194 = vmul.f32 %v114, %v114
    %v195 = vmul.f32 %v115, %v115
    %v196 = vmul.f32 %v116, %v116
    %v197 = vmul.f32 %v117, %v117
    %v198 = vmul.f32 %v118, %v118
    %v199 = vmul.f32 %v119, %v119
    %v200 = vsel %vm39, %v184, 0.0
    %201 = vadd.xlane.f32.xlu0 %v200
    %v202 = vpop.xlane.xlu0 %201
    %v203 = vsel %vm39, %v185, 0.0
    %204 = vadd.xlane.f32.xlu0 %v203
    %v205 = vpop.xlane.xlu0 %204
    %v206 = vsel %vm39, %v186, 0.0
    %207 = vadd.xlane.f32.xlu0 %v206
    %v208 = vpop.xlane.xlu0 %207
    %v209 = vsel %vm39, %v187, 0.0
    %210 = vadd.xlane.f32.xlu0 %v209
    %v211 = vpop.xlane.xlu0 %210
    %v212 = vsel %vm39, %v188, 0.0
    %213 = vadd.xlane.f32.xlu0 %v212
    %v214 = vpop.xlane.xlu0 %213
    %v215 = vsel %vm39, %v189, 0.0
    %216 = vadd.xlane.f32.xlu0 %v215
    %v217 = vpop.xlane.xlu0 %216
    %v218 = vsel %vm39, %v190, 0.0
    %219 = vadd.xlane.f32.xlu0 %v218
    %v220 = vpop.xlane.xlu0 %219
    %v221 = vsel %vm39, %v191, 0.0
    %222 = vadd.xlane.f32.xlu0 %v221
    %v223 = vpop.xlane.xlu0 %222
    %v224 = vsel %vm39, %v192, 0.0
    %225 = vadd.xlane.f32.xlu0 %v224
    %v226 = vpop.xlane.xlu0 %225
    %v227 = vsel %vm39, %v193, 0.0
    %228 = vadd.xlane.f32.xlu0 %v227
    %v229 = vpop.xlane.xlu0 %228
    %v230 = vsel %vm39, %v194, 0.0
    %231 = vadd.xlane.f32.xlu0 %v230
    %v232 = vpop.xlane.xlu0 %231
    %v233 = vsel %vm39, %v195, 0.0
    %234 = vadd.xlane.f32.xlu0 %v233
    %v235 = vpop.xlane.xlu0 %234
    %v236 = vsel %vm39, %v196, 0.0
    %237 = vadd.xlane.f32.xlu0 %v236
    %v238 = vpop.xlane.xlu0 %237
    %v239 = vsel %vm39, %v197, 0.0
    %240 = vadd.xlane.f32.xlu0 %v239
    %v241 = vpop.xlane.xlu0 %240
    %v242 = vsel %vm39, %v198, 0.0
    %243 = vadd.xlane.f32.xlu0 %v242
    %v244 = vpop.xlane.xlu0 %243
    %v245 = vsel %vm39, %v199, 0.0
    %246 = vadd.xlane.f32.xlu0 %v245
    %v247 = vpop.xlane.xlu0 %246
    %v248 = vsel %vm39, %v120, 0.0
    %249 = vadd.xlane.f32.xlu0 %v248
    %v250 = vpop.xlane.xlu0 %249
    %v251 = vsel %vm39, %v121, 0.0
    %252 = vadd.xlane.f32.xlu0 %v251
    %v253 = vpop.xlane.xlu0 %252
    %v254 = vsel %vm39, %v122, 0.0
    %255 = vadd.xlane.f32.xlu0 %v254
    %v256 = vpop.xlane.xlu0 %255
    %v257 = vsel %vm39, %v123, 0.0
    %258 = vadd.xlane.f32.xlu0 %v257
    %v259 = vpop.xlane.xlu0 %258
    %v260 = vsel %vm39, %v124, 0.0
    %261 = vadd.xlane.f32.xlu0 %v260
    %v262 = vpop.xlane.xlu0 %261
    %v263 = vsel %vm39, %v125, 0.0
    %264 = vadd.xlane.f32.xlu0 %v263
    %v265 = vpop.xlane.xlu0 %264
    %v266 = vsel %vm39, %v126, 0.0
    %267 = vadd.xlane.f32.xlu0 %v266
    %v268 = vpop.xlane.xlu0 %267
    %v269 = vsel %vm39, %v127, 0.0
    %270 = vadd.xlane.f32.xlu0 %v269
    %v271 = vpop.xlane.xlu0 %270
    %v272 = vsel %vm39, %v128, 0.0
    %273 = vadd.xlane.f32.xlu0 %v272
    %v274 = vpop.xlane.xlu0 %273
    %v275 = vsel %vm39, %v129, 0.0
    %276 = vadd.xlane.f32.xlu0 %v275
    %v277 = vpop.xlane.xlu0 %276
    %v278 = vsel %vm39, %v130, 0.0
    %279 = vadd.xlane.f32.xlu0 %v278
    %v280 = vpop.xlane.xlu0 %279
    %v281 = vsel %vm39, %v131, 0.0
    %282 = vadd.xlane.f32.xlu0 %v281
    %v283 = vpop.xlane.xlu0 %282
    %v284 = vsel %vm39, %v132, 0.0
    %285 = vadd.xlane.f32.xlu0 %v284
    %v286 = vpop.xlane.xlu0 %285
    %v287 = vsel %vm39, %v133, 0.0
    %288 = vadd.xlane.f32.xlu0 %v287
    %v289 = vpop.xlane.xlu0 %288
    %v290 = vsel %vm39, %v134, 0.0
    %291 = vadd.xlane.f32.xlu0 %v290
    %v292 = vpop.xlane.xlu0 %291
    %v293 = vsel %vm39, %v135, 0.0
    %294 = vadd.xlane.f32.xlu0 %v293
    %v295 = vpop.xlane.xlu0 %294
    %v296 = vsel %vm39, %v168, 0.0
    %297 = vadd.xlane.f32.xlu0 %v296
    %v298 = vpop.xlane.xlu0 %297
    %v299 = vsel %vm39, %v169, 0.0
    %300 = vadd.xlane.f32.xlu0 %v299
    %v301 = vpop.xlane.xlu0 %300
    %v302 = vsel %vm39, %v170, 0.0
    %303 = vadd.xlane.f32.xlu0 %v302
    %v304 = vpop.xlane.xlu0 %303
    %v305 = vsel %vm39, %v171, 0.0
    %306 = vadd.xlane.f32.xlu0 %v305
    %v307 = vpop.xlane.xlu0 %306
    %v308 = vsel %vm39, %v172, 0.0
    %309 = vadd.xlane.f32.xlu0 %v308
    %v310 = vpop.xlane.xlu0 %309
    %v311 = vsel %vm39, %v173, 0.0
    %312 = vadd.xlane.f32.xlu0 %v311
    %v313 = vpop.xlane.xlu0 %312
    %v314 = vsel %vm39, %v174, 0.0
    %315 = vadd.xlane.f32.xlu0 %v314
    %v316 = vpop.xlane.xlu0 %315
    %v317 = vsel %vm39, %v175, 0.0
    %318 = vadd.xlane.f32.xlu0 %v317
    %v319 = vpop.xlane.xlu0 %318
    %v320 = vsel %vm39, %v176, 0.0
    %321 = vadd.xlane.f32.xlu0 %v320
    %v322 = vpop.xlane.xlu0 %321
    %v323 = vsel %vm39, %v177, 0.0
    %324 = vadd.xlane.f32.xlu0 %v323
    %v325 = vpop.xlane.xlu0 %324
    %v326 = vsel %vm39, %v178, 0.0
    %327 = vadd.xlane.f32.xlu0 %v326
    %v328 = vpop.xlane.xlu0 %327
    %v329 = vsel %vm39, %v179, 0.0
    %330 = vadd.xlane.f32.xlu0 %v329
    %v331 = vpop.xlane.xlu0 %330
    %v332 = vsel %vm39, %v180, 0.0
    %333 = vadd.xlane.f32.xlu0 %v332
    %v334 = vpop.xlane.xlu0 %333
    %v335 = vsel %vm39, %v181, 0.0
    %336 = vadd.xlane.f32.xlu0 %v335
    %v337 = vpop.xlane.xlu0 %336
    %v338 = vsel %vm39, %v182, 0.0
    %339 = vadd.xlane.f32.xlu0 %v338
    %v340 = vpop.xlane.xlu0 %339
    %v341 = vsel %vm39, %v183, 0.0
    %342 = vadd.xlane.f32.xlu0 %v341
    %v343 = vpop.xlane.xlu0 %342
    %v344 = vmul.f32 %v168, %v184
    %v345 = vmul.f32 %v169, %v185
    %v346 = vmul.f32 %v170, %v186
    %v347 = vmul.f32 %v171, %v187
    %v348 = vmul.f32 %v172, %v188
    %v349 = vmul.f32 %v173, %v189
    %v350 = vmul.f32 %v174, %v190
    %v351 = vmul.f32 %v175, %v191
    %v352 = vmul.f32 %v176, %v192
    %v353 = vmul.f32 %v177, %v193
    %v354 = vmul.f32 %v178, %v194
    %v355 = vmul.f32 %v179, %v195
    %v356 = vmul.f32 %v180, %v196
    %v357 = vmul.f32 %v181, %v197
    %v358 = vmul.f32 %v182, %v198
    %v359 = vmul.f32 %v183, %v199
    %v360 = vsel %vm39, %v344, 0.0
    %361 = vadd.xlane.f32.xlu0 %v360
    %v362 = vpop.xlane.xlu0 %361
    %v363 = vsel %vm39, %v345, 0.0
    %364 = vadd.xlane.f32.xlu0 %v363
    %v365 = vpop.xlane.xlu0 %364
    %v366 = vsel %vm39, %v346, 0.0
    %367 = vadd.xlane.f32.xlu0 %v366
    %v368 = vpop.xlane.xlu0 %367
    %v369 = vsel %vm39, %v347, 0.0
    %370 = vadd.xlane.f32.xlu0 %v369
    %v371 = vpop.xlane.xlu0 %370
    %v372 = vsel %vm39, %v348, 0.0
    %373 = vadd.xlane.f32.xlu0 %v372
    %v374 = vpop.xlane.xlu0 %373
    %v375 = vsel %vm39, %v349, 0.0
    %376 = vadd.xlane.f32.xlu0 %v375
    %v377 = vpop.xlane.xlu0 %376
    %v378 = vsel %vm39, %v350, 0.0
    %379 = vadd.xlane.f32.xlu0 %v378
    %v380 = vpop.xlane.xlu0 %379
    %v381 = vsel %vm39, %v351, 0.0
    %382 = vadd.xlane.f32.xlu0 %v381
    %v383 = vpop.xlane.xlu0 %382
    %v384 = vsel %vm39, %v352, 0.0
    %385 = vadd.xlane.f32.xlu0 %v384
    %v386 = vpop.xlane.xlu0 %385
    %v387 = vsel %vm39, %v353, 0.0
    %388 = vadd.xlane.f32.xlu0 %v387
    %v389 = vpop.xlane.xlu0 %388
    %v390 = vsel %vm39, %v354, 0.0
    %391 = vadd.xlane.f32.xlu0 %v390
    %v392 = vpop.xlane.xlu0 %391
    %v393 = vsel %vm39, %v355, 0.0
    %394 = vadd.xlane.f32.xlu0 %v393
    %v395 = vpop.xlane.xlu0 %394
    %v396 = vsel %vm39, %v356, 0.0
    %397 = vadd.xlane.f32.xlu0 %v396
    %v398 = vpop.xlane.xlu0 %397
    %v399 = vsel %vm39, %v357, 0.0
    %400 = vadd.xlane.f32.xlu0 %v399
    %v401 = vpop.xlane.xlu0 %400
    %v402 = vsel %vm39, %v358, 0.0
    %403 = vadd.xlane.f32.xlu0 %v402
    %v404 = vpop.xlane.xlu0 %403
    %v405 = vsel %vm39, %v359, 0.0
    %406 = vadd.xlane.f32.xlu0 %v405
    %v407 = vpop.xlane.xlu0 %406
    %v408 = vmul.f32 %v168, %v120
    %v409 = vmul.f32 %v169, %v121
    %v410 = vmul.f32 %v170, %v122
    %v411 = vmul.f32 %v171, %v123
    %v412 = vmul.f32 %v172, %v124
    %v413 = vmul.f32 %v173, %v125
    %v414 = vmul.f32 %v174, %v126
    %v415 = vmul.f32 %v175, %v127
    %v416 = vmul.f32 %v176, %v128
    %v417 = vmul.f32 %v177, %v129
    %v418 = vmul.f32 %v178, %v130
    %v419 = vmul.f32 %v179, %v131
    %v420 = vmul.f32 %v180, %v132
    %v421 = vmul.f32 %v181, %v133
    %v422 = vmul.f32 %v182, %v134
    %v423 = vmul.f32 %v183, %v135
    %v424 = vsel %vm39, %v408, 0.0
    %425 = vadd.xlane.f32.xlu0 %v424
    %v426 = vpop.xlane.xlu0 %425
    %v427 = vsel %vm39, %v409, 0.0
    %428 = vadd.xlane.f32.xlu0 %v427
    %v429 = vpop.xlane.xlu0 %428
    %v430 = vsel %vm39, %v410, 0.0
    %431 = vadd.xlane.f32.xlu0 %v430
    %v432 = vpop.xlane.xlu0 %431
    %v433 = vsel %vm39, %v411, 0.0
    %434 = vadd.xlane.f32.xlu0 %v433
    %v435 = vpop.xlane.xlu0 %434
    %v436 = vsel %vm39, %v412, 0.0
    %437 = vadd.xlane.f32.xlu0 %v436
    %v438 = vpop.xlane.xlu0 %437
    %v439 = vsel %vm39, %v413, 0.0
    %440 = vadd.xlane.f32.xlu0 %v439
    %v441 = vpop.xlane.xlu0 %440
    %v442 = vsel %vm39, %v414, 0.0
    %443 = vadd.xlane.f32.xlu0 %v442
    %v444 = vpop.xlane.xlu0 %443
    %v445 = vsel %vm39, %v415, 0.0
    %446 = vadd.xlane.f32.xlu0 %v445
    %v447 = vpop.xlane.xlu0 %446
    %v448 = vsel %vm39, %v416, 0.0
    %449 = vadd.xlane.f32.xlu0 %v448
    %v450 = vpop.xlane.xlu0 %449
    %v451 = vsel %vm39, %v417, 0.0
    %452 = vadd.xlane.f32.xlu0 %v451
    %v453 = vpop.xlane.xlu0 %452
    %v454 = vsel %vm39, %v418, 0.0
    %455 = vadd.xlane.f32.xlu0 %v454
    %v456 = vpop.xlane.xlu0 %455
    %v457 = vsel %vm39, %v419, 0.0
    %458 = vadd.xlane.f32.xlu0 %v457
    %v459 = vpop.xlane.xlu0 %458
    %v460 = vsel %vm39, %v420, 0.0
    %461 = vadd.xlane.f32.xlu0 %v460
    %v462 = vpop.xlane.xlu0 %461
    %v463 = vsel %vm39, %v421, 0.0
    %464 = vadd.xlane.f32.xlu0 %v463
    %v465 = vpop.xlane.xlu0 %464
    %v466 = vsel %vm39, %v422, 0.0
    %467 = vadd.xlane.f32.xlu0 %v466
    %v468 = vpop.xlane.xlu0 %467
    %v469 = vsel %vm39, %v423, 0.0
    %470 = vadd.xlane.f32.xlu0 %v469
    %v471 = vpop.xlane.xlu0 %470
    %v472 = vmin.f32 %v298, %v310
    %v473 = vmin.f32 %v301, %v313
    %v474 = vmin.f32 %v304, %v316
    %v475 = vmin.f32 %v307, %v319
    %v476 = vmin.f32 %v472, %v322
    %v477 = vmin.f32 %v473, %v325
    %v478 = vmin.f32 %v474, %v328
    %v479 = vmin.f32 %v475, %v331
    %v480 = vmin.f32 %v476, %v334
    %v481 = vmin.f32 %v477, %v337
    %v482 = vmin.f32 %v478, %v340
    %v483 = vmin.f32 %v479, %v343
    %v484 = vmin.f32 %v480, %v481
    %v485 = vmin.f32 %v482, %v483
    %v486 = vmin.f32 %v484, %v485
    %v487 = vrot.slane %v486, 4
    %v488 = vmin.f32 %v486, %v487
    %v489 = vrot.slane %v488, 2
    %v490 = vmin.f32 %v488, %v489
    %v491 = vrot.slane %v490, 1
    %v492 = vmin.f32 %v490, %v491
    %v493 = vmax.f32 %v298, %v310
    %v494 = vmax.f32 %v301, %v313
    %v495 = vmax.f32 %v304, %v316
    %v496 = vmax.f32 %v307, %v319
    %v497 = vmax.f32 %v493, %v322
    %v498 = vmax.f32 %v494, %v325
    %v499 = vmax.f32 %v495, %v328
    %v500 = vmax.f32 %v496, %v331
    %v501 = vmax.f32 %v497, %v334
    %v502 = vmax.f32 %v498, %v337
    %v503 = vmax.f32 %v499, %v340
    %v504 = vmax.f32 %v500, %v343
    %v505 = vmax.f32 %v501, %v502
    %v506 = vmax.f32 %v503, %v504
    %v507 = vmax.f32 %v505, %v506
    %v508 = vrot.slane %v507, 4
    %v509 = vmax.f32 %v507, %v508
    %v510 = vrot.slane %v509, 2
    %v511 = vmax.f32 %v509, %v510
    %v512 = vrot.slane %v511, 1
    %v513 = vmax.f32 %v511, %v512
    %v514 = vadd.f32 %v298, %v301
    %v515 = vadd.f32 %v514, %v304
    %v516 = vadd.f32 %v515, %v307
    %v517 = vadd.f32 %v516, %v310
    %v518 = vadd.f32 %v517, %v313
    %v519 = vadd.f32 %v518, %v316
    %v520 = vadd.f32 %v519, %v319
    %v521 = vadd.f32 %v520, %v322
    %v522 = vadd.f32 %v521, %v325
    %v523 = vadd.f32 %v522, %v328
    %v524 = vadd.f32 %v523, %v331
    %v525 = vadd.f32 %v524, %v334
    %v526 = vadd.f32 %v525, %v337
    %v527 = vadd.f32 %v526, %v340
    %v528 = vadd.f32 %v527, %v343
    %v529 = vrot.slane %v528, 4
    %v530 = vadd.f32 %v528, %v529
    %v531 = vrot.slane %v530, 2
    %v532 = vadd.f32 %v530, %v531
    %v533 = vrot.slane %v532, 1
    %v534 = vadd.f32 %v532, %v533
    %vm535 = vcmp.ge.f32.partialorder %v492, 16.0
    %v536 = vsel %vm535, 1, 0
    %v537 = vcvt.s32.f32 %v536
    %vm538 = vcmp.le.f32.partialorder %v513, 0.0
    %v539 = vsel %vm538, 1, 0
    %v540 = vcvt.s32.f32 %v539
    %v541 = vsub.f32 1.0, %v537
    %v542 = vmul.f32 %v540, %v541
    %v543 = vsub.f32 %v541, %v542
    %v544 = vmul.f32 %v202, 0.0625
    %v545 = vmul.f32 %v205, 0.0625
    %v546 = vmul.f32 %v208, 0.0625
    %v547 = vmul.f32 %v211, 0.0625
    %v548 = vmul.f32 %v214, 0.0625
    %v549 = vmul.f32 %v217, 0.0625
    %v550 = vmul.f32 %v220, 0.0625
    %v551 = vmul.f32 %v223, 0.0625
    %v552 = vmul.f32 %v226, 0.0625
    %v553 = vmul.f32 %v229, 0.0625
    %v554 = vmul.f32 %v232, 0.0625
    %v555 = vmul.f32 %v235, 0.0625
    %v556 = vmul.f32 %v238, 0.0625
    %v557 = vmul.f32 %v241, 0.0625
    %v558 = vmul.f32 %v244, 0.0625
    %v559 = vmul.f32 %v247, 0.0625
    %v560 = vadd.f32 %v544, 1e-05
    %v561 = vadd.f32 %v545, 1e-05
    %v562 = vadd.f32 %v546, 1e-05
    %v563 = vadd.f32 %v547, 1e-05
    %v564 = vadd.f32 %v548, 1e-05
    %v565 = vadd.f32 %v549, 1e-05
    %v566 = vadd.f32 %v550, 1e-05
    %v567 = vadd.f32 %v551, 1e-05
    %v568 = vadd.f32 %v552, 1e-05
    %v569 = vadd.f32 %v553, 1e-05
    %v570 = vadd.f32 %v554, 1e-05
    %v571 = vadd.f32 %v555, 1e-05
    %v572 = vadd.f32 %v556, 1e-05
    %v573 = vadd.f32 %v557, 1e-05
    %v574 = vadd.f32 %v558, 1e-05
    %v575 = vadd.f32 %v559, 1e-05
    %v576 = vrsqrt.pop %v560
    %v577 = vmul.f32 %v560, %v576
    %vm578 = vcmp.eq.f32.partialorder %v560, inf
    %v579 = vsel %vm578, %v560, %v577
    %vm580 = vcmp.eq.f32.partialorder %v560, 0.0
    %v581 = vand.u32 %v560, 2147483648
    %v582 = vsel %vm580, %v581, %v579
    %v583 = vrsqrt.pop %v561
    %v584 = vmul.f32 %v561, %v583
    %vm585 = vcmp.eq.f32.partialorder %v561, inf
    %v586 = vsel %vm585, %v561, %v584
    %vm587 = vcmp.eq.f32.partialorder %v561, 0.0
    %v588 = vand.u32 %v561, 2147483648
    %v589 = vsel %vm587, %v588, %v586
    %v590 = vrsqrt.pop %v562
    %v591 = vmul.f32 %v562, %v590
    %vm592 = vcmp.eq.f32.partialorder %v562, inf
    %v593 = vsel %vm592, %v562, %v591
    %vm594 = vcmp.eq.f32.partialorder %v562, 0.0
    %v595 = vand.u32 %v562, 2147483648
    %v596 = vsel %vm594, %v595, %v593
    %v597 = vrsqrt.pop %v563
    %v598 = vmul.f32 %v563, %v597
    %vm599 = vcmp.eq.f32.partialorder %v563, inf
    %v600 = vsel %vm599, %v563, %v598
    %vm601 = vcmp.eq.f32.partialorder %v563, 0.0
    %v602 = vand.u32 %v563, 2147483648
    %v603 = vsel %vm601, %v602, %v600
    %v604 = vrsqrt.pop %v564
    %v605 = vmul.f32 %v564, %v604
    %vm606 = vcmp.eq.f32.partialorder %v564, inf
    %v607 = vsel %vm606, %v564, %v605
    %vm608 = vcmp.eq.f32.partialorder %v564, 0.0
    %v609 = vand.u32 %v564, 2147483648
    %v610 = vsel %vm608, %v609, %v607
    %v611 = vrsqrt.pop %v565
    %v612 = vmul.f32 %v565, %v611
    %vm613 = vcmp.eq.f32.partialorder %v565, inf
    %v614 = vsel %vm613, %v565, %v612
    %vm615 = vcmp.eq.f32.partialorder %v565, 0.0
    %v616 = vand.u32 %v565, 2147483648
    %v617 = vsel %vm615, %v616, %v614
    %v618 = vrsqrt.pop %v566
    %v619 = vmul.f32 %v566, %v618
    %vm620 = vcmp.eq.f32.partialorder %v566, inf
    %v621 = vsel %vm620, %v566, %v619
    %vm622 = vcmp.eq.f32.partialorder %v566, 0.0
    %v623 = vand.u32 %v566, 2147483648
    %v624 = vsel %vm622, %v623, %v621
    %v625 = vrsqrt.pop %v567
    %v626 = vmul.f32 %v567, %v625
    %vm627 = vcmp.eq.f32.partialorder %v567, inf
    %v628 = vsel %vm627, %v567, %v626
    %vm629 = vcmp.eq.f32.partialorder %v567, 0.0
    %v630 = vand.u32 %v567, 2147483648
    %v631 = vsel %vm629, %v630, %v628
    %v632 = vrsqrt.pop %v568
    %v633 = vmul.f32 %v568, %v632
    %vm634 = vcmp.eq.f32.partialorder %v568, inf
    %v635 = vsel %vm634, %v568, %v633
    %vm636 = vcmp.eq.f32.partialorder %v568, 0.0
    %v637 = vand.u32 %v568, 2147483648
    %v638 = vsel %vm636, %v637, %v635
    %v639 = vrsqrt.pop %v569
    %v640 = vmul.f32 %v569, %v639
    %vm641 = vcmp.eq.f32.partialorder %v569, inf
    %v642 = vsel %vm641, %v569, %v640
    %vm643 = vcmp.eq.f32.partialorder %v569, 0.0
    %v644 = vand.u32 %v569, 2147483648
    %v645 = vsel %vm643, %v644, %v642
    %v646 = vrsqrt.pop %v570
    %v647 = vmul.f32 %v570, %v646
    %vm648 = vcmp.eq.f32.partialorder %v570, inf
    %v649 = vsel %vm648, %v570, %v647
    %vm650 = vcmp.eq.f32.partialorder %v570, 0.0
    %v651 = vand.u32 %v570, 2147483648
    %v652 = vsel %vm650, %v651, %v649
    %v653 = vrsqrt.pop %v571
    %v654 = vmul.f32 %v571, %v653
    %vm655 = vcmp.eq.f32.partialorder %v571, inf
    %v656 = vsel %vm655, %v571, %v654
    %vm657 = vcmp.eq.f32.partialorder %v571, 0.0
    %v658 = vand.u32 %v571, 2147483648
    %v659 = vsel %vm657, %v658, %v656
    %v660 = vrsqrt.pop %v572
    %v661 = vmul.f32 %v572, %v660
    %vm662 = vcmp.eq.f32.partialorder %v572, inf
    %v663 = vsel %vm662, %v572, %v661
    %vm664 = vcmp.eq.f32.partialorder %v572, 0.0
    %v665 = vand.u32 %v572, 2147483648
    %v666 = vsel %vm664, %v665, %v663
    %v667 = vrsqrt.pop %v573
    %v668 = vmul.f32 %v573, %v667
    %vm669 = vcmp.eq.f32.partialorder %v573, inf
    %v670 = vsel %vm669, %v573, %v668
    %vm671 = vcmp.eq.f32.partialorder %v573, 0.0
    %v672 = vand.u32 %v573, 2147483648
    %v673 = vsel %vm671, %v672, %v670
    %v674 = vrsqrt.pop %v574
    %v675 = vmul.f32 %v574, %v674
    %vm676 = vcmp.eq.f32.partialorder %v574, inf
    %v677 = vsel %vm676, %v574, %v675
    %vm678 = vcmp.eq.f32.partialorder %v574, 0.0
    %v679 = vand.u32 %v574, 2147483648
    %v680 = vsel %vm678, %v679, %v677
    %v681 = vrsqrt.pop %v575
    %v682 = vmul.f32 %v575, %v681
    %vm683 = vcmp.eq.f32.partialorder %v575, inf
    %v684 = vsel %vm683, %v575, %v682
    %vm685 = vcmp.eq.f32.partialorder %v575, 0.0
    %v686 = vand.u32 %v575, 2147483648
    %v687 = vsel %vm685, %v686, %v684
    %v688 = vmul.f32 %v250, 0.0625
    %v689 = vmul.f32 %v253, 0.0625
    %v690 = vmul.f32 %v256, 0.0625
    %v691 = vmul.f32 %v259, 0.0625
    %v692 = vmul.f32 %v262, 0.0625
    %v693 = vmul.f32 %v265, 0.0625
    %v694 = vmul.f32 %v268, 0.0625
    %v695 = vmul.f32 %v271, 0.0625
    %v696 = vmul.f32 %v274, 0.0625
    %v697 = vmul.f32 %v277, 0.0625
    %v698 = vmul.f32 %v280, 0.0625
    %v699 = vmul.f32 %v283, 0.0625
    %v700 = vmul.f32 %v286, 0.0625
    %v701 = vmul.f32 %v289, 0.0625
    %v702 = vmul.f32 %v292, 0.0625
    %v703 = vmul.f32 %v295, 0.0625
    %v704 = vrsqrt.pop %v362
    %v705 = vmul.f32 %v362, %v704
    %vm706 = vcmp.eq.f32.partialorder %v362, inf
    %v707 = vsel %vm706, %v362, %v705
    %vm708 = vcmp.eq.f32.partialorder %v362, 0.0
    %v709 = vand.u32 %v362, 2147483648
    %v710 = vsel %vm708, %v709, %v707
    %v711 = vrsqrt.pop %v365
    %v712 = vmul.f32 %v365, %v711
    %vm713 = vcmp.eq.f32.partialorder %v365, inf
    %v714 = vsel %vm713, %v365, %v712
    %vm715 = vcmp.eq.f32.partialorder %v365, 0.0
    %v716 = vand.u32 %v365, 2147483648
    %v717 = vsel %vm715, %v716, %v714
    %v718 = vrsqrt.pop %v368
    %v719 = vmul.f32 %v368, %v718
    %vm720 = vcmp.eq.f32.partialorder %v368, inf
    %v721 = vsel %vm720, %v368, %v719
    %vm722 = vcmp.eq.f32.partialorder %v368, 0.0
    %v723 = vand.u32 %v368, 2147483648
    %v724 = vsel %vm722, %v723, %v721
    %v725 = vrsqrt.pop %v371
    %v726 = vmul.f32 %v371, %v725
    %vm727 = vcmp.eq.f32.partialorder %v371, inf
    %v728 = vsel %vm727, %v371, %v726
    %vm729 = vcmp.eq.f32.partialorder %v371, 0.0
    %v730 = vand.u32 %v371, 2147483648
    %v731 = vsel %vm729, %v730, %v728
    %v732 = vrsqrt.pop %v374
    %v733 = vmul.f32 %v374, %v732
    %vm734 = vcmp.eq.f32.partialorder %v374, inf
    %v735 = vsel %vm734, %v374, %v733
    %vm736 = vcmp.eq.f32.partialorder %v374, 0.0
    %v737 = vand.u32 %v374, 2147483648
    %v738 = vsel %vm736, %v737, %v735
    %v739 = vrsqrt.pop %v377
    %v740 = vmul.f32 %v377, %v739
    %vm741 = vcmp.eq.f32.partialorder %v377, inf
    %v742 = vsel %vm741, %v377, %v740
    %vm743 = vcmp.eq.f32.partialorder %v377, 0.0
    %v744 = vand.u32 %v377, 2147483648
    %v745 = vsel %vm743, %v744, %v742
    %v746 = vrsqrt.pop %v380
    %v747 = vmul.f32 %v380, %v746
    %vm748 = vcmp.eq.f32.partialorder %v380, inf
    %v749 = vsel %vm748, %v380, %v747
    %vm750 = vcmp.eq.f32.partialorder %v380, 0.0
    %v751 = vand.u32 %v380, 2147483648
    %v752 = vsel %vm750, %v751, %v749
    %v753 = vrsqrt.pop %v383
    %v754 = vmul.f32 %v383, %v753
    %vm755 = vcmp.eq.f32.partialorder %v383, inf
    %v756 = vsel %vm755, %v383, %v754
    %vm757 = vcmp.eq.f32.partialorder %v383, 0.0
    %v758 = vand.u32 %v383, 2147483648
    %v759 = vsel %vm757, %v758, %v756
    %v760 = vrsqrt.pop %v386
    %v761 = vmul.f32 %v386, %v760
    %vm762 = vcmp.eq.f32.partialorder %v386, inf
    %v763 = vsel %vm762, %v386, %v761
    %vm764 = vcmp.eq.f32.partialorder %v386, 0.0
    %v765 = vand.u32 %v386, 2147483648
    %v766 = vsel %vm764, %v765, %v763
    %v767 = vrsqrt.pop %v389
    %v768 = vmul.f32 %v389, %v767
    %vm769 = vcmp.eq.f32.partialorder %v389, inf
    %v770 = vsel %vm769, %v389, %v768
    %vm771 = vcmp.eq.f32.partialorder %v389, 0.0
    %v772 = vand.u32 %v389, 2147483648
    %v773 = vsel %vm771, %v772, %v770
    %v774 = vrsqrt.pop %v392
    %v775 = vmul.f32 %v392, %v774
    %vm776 = vcmp.eq.f32.partialorder %v392, inf
    %v777 = vsel %vm776, %v392, %v775
    %vm778 = vcmp.eq.f32.partialorder %v392, 0.0
    %v779 = vand.u32 %v392, 2147483648
    %v780 = vsel %vm778, %v779, %v777
    %v781 = vrsqrt.pop %v395
    %v782 = vmul.f32 %v395, %v781
    %vm783 = vcmp.eq.f32.partialorder %v395, inf
    %v784 = vsel %vm783, %v395, %v782
    %vm785 = vcmp.eq.f32.partialorder %v395, 0.0
    %v786 = vand.u32 %v395, 2147483648
    %v787 = vsel %vm785, %v786, %v784
    %v788 = vrsqrt.pop %v398
    %v789 = vmul.f32 %v398, %v788
    %vm790 = vcmp.eq.f32.partialorder %v398, inf
    %v791 = vsel %vm790, %v398, %v789
    %vm792 = vcmp.eq.f32.partialorder %v398, 0.0
    %v793 = vand.u32 %v398, 2147483648
    %v794 = vsel %vm792, %v793, %v791
    %v795 = vrsqrt.pop %v401
    %v796 = vmul.f32 %v401, %v795
    %vm797 = vcmp.eq.f32.partialorder %v401, inf
    %v798 = vsel %vm797, %v401, %v796
    %vm799 = vcmp.eq.f32.partialorder %v401, 0.0
    %v800 = vand.u32 %v401, 2147483648
    %v801 = vsel %vm799, %v800, %v798
    %v802 = vrsqrt.pop %v404
    %v803 = vmul.f32 %v404, %v802
    %vm804 = vcmp.eq.f32.partialorder %v404, inf
    %v805 = vsel %vm804, %v404, %v803
    %vm806 = vcmp.eq.f32.partialorder %v404, 0.0
    %v807 = vand.u32 %v404, 2147483648
    %v808 = vsel %vm806, %v807, %v805
    %v809 = vrsqrt.pop %v407
    %v810 = vmul.f32 %v407, %v809
    %vm811 = vcmp.eq.f32.partialorder %v407, inf
    %v812 = vsel %vm811, %v407, %v810
    %vm813 = vcmp.eq.f32.partialorder %v407, 0.0
    %v814 = vand.u32 %v407, 2147483648
    %v815 = vsel %vm813, %v814, %v812
    %v816 = vmax.f32 %v534, 1.0
    %v817 = vrsqrt.pop %v816
    %v818 = vmul.f32 %v816, %v817
    %vm819 = vcmp.eq.f32.partialorder %v816, inf
    %v820 = vsel %vm819, %v816, %v818
    %vm821 = vcmp.eq.f32.partialorder %v816, 0.0
    %v822 = vand.u32 %v816, 2147483648
    %v823 = vsel %vm821, %v822, %v820
    %v824 = vrcp.pop %v823
    %v825 = vmul.f32 %v710, %v824
    %v826 = vmul.f32 %v717, %v824
    %v827 = vmul.f32 %v724, %v824
    %v828 = vmul.f32 %v731, %v824
    %v829 = vmul.f32 %v738, %v824
    %v830 = vmul.f32 %v745, %v824
    %v831 = vmul.f32 %v752, %v824
    %v832 = vmul.f32 %v759, %v824
    %v833 = vmul.f32 %v766, %v824
    %v834 = vmul.f32 %v773, %v824
    %v835 = vmul.f32 %v780, %v824
    %v836 = vmul.f32 %v787, %v824
    %v837 = vmul.f32 %v794, %v824
    %v838 = vmul.f32 %v801, %v824
    %v839 = vmul.f32 %v808, %v824
    %v840 = vmul.f32 %v815, %v824
    %v841 = vsub.f32 %v250, %v426
    %v842 = vsub.f32 %v253, %v429
    %v843 = vsub.f32 %v256, %v432
    %v844 = vsub.f32 %v259, %v435
    %v845 = vsub.f32 %v262, %v438
    %v846 = vsub.f32 %v265, %v441
    %v847 = vsub.f32 %v268, %v444
    %v848 = vsub.f32 %v271, %v447
    %v849 = vsub.f32 %v274, %v450
    %v850 = vsub.f32 %v277, %v453
    %v851 = vsub.f32 %v280, %v456
    %v852 = vsub.f32 %v283, %v459
    %v853 = vsub.f32 %v286, %v462
    %v854 = vsub.f32 %v289, %v465
    %v855 = vsub.f32 %v292, %v468
    %v856 = vsub.f32 %v295, %v471
    %v857 = vsub.f32 2048.0, %v534
    %v858 = vmax.f32 %v857, 1.0
    %v859 = vrcp.pop %v858
    %v860 = vmul.f32 %v841, %v859
    %v861 = vmul.f32 %v842, %v859
    %v862 = vmul.f32 %v843, %v859
    %v863 = vmul.f32 %v844, %v859
    %v864 = vmul.f32 %v845, %v859
    %v865 = vmul.f32 %v846, %v859
    %v866 = vmul.f32 %v847, %v859
    %v867 = vmul.f32 %v848, %v859
    %v868 = vmul.f32 %v849, %v859
    %v869 = vmul.f32 %v850, %v859
    %v870 = vmul.f32 %v851, %v859
    %v871 = vmul.f32 %v852, %v859
    %v872 = vmul.f32 %v853, %v859
    %v873 = vmul.f32 %v854, %v859
    %v874 = vmul.f32 %v855, %v859
    %v875 = vmul.f32 %v856, %v859
    %v876 = vadd.f32 %v825, %v860
    %v877 = vadd.f32 %v826, %v861
    %v878 = vadd.f32 %v827, %v862
    %v879 = vadd.f32 %v828, %v863
    %v880 = vadd.f32 %v829, %v864
    %v881 = vadd.f32 %v830, %v865
    %v882 = vadd.f32 %v831, %v866
    %v883 = vadd.f32 %v832, %v867
    %v884 = vadd.f32 %v833, %v868
    %v885 = vadd.f32 %v834, %v869
    %v886 = vadd.f32 %v835, %v870
    %v887 = vadd.f32 %v836, %v871
    %v888 = vadd.f32 %v837, %v872
    %v889 = vadd.f32 %v838, %v873
    %v890 = vadd.f32 %v839, %v874
    %v891 = vadd.f32 %v840, %v875
    %v892 = vmul.f32 %v537, %v582
    %v893 = vmul.f32 %v537, %v589
    %v894 = vmul.f32 %v537, %v596
    %v895 = vmul.f32 %v537, %v603
    %v896 = vmul.f32 %v537, %v610
    %v897 = vmul.f32 %v537, %v617
    %v898 = vmul.f32 %v537, %v624
    %v899 = vmul.f32 %v537, %v631
    %v900 = vmul.f32 %v537, %v638
    %v901 = vmul.f32 %v537, %v645
    %v902 = vmul.f32 %v537, %v652
    %v903 = vmul.f32 %v537, %v659
    %v904 = vmul.f32 %v537, %v666
    %v905 = vmul.f32 %v537, %v673
    %v906 = vmul.f32 %v537, %v680
    %v907 = vmul.f32 %v537, %v687
    %v908 = vmul.f32 %v542, %v688
    %v909 = vmul.f32 %v542, %v689
    %v910 = vmul.f32 %v542, %v690
    %v911 = vmul.f32 %v542, %v691
    %v912 = vmul.f32 %v542, %v692
    %v913 = vmul.f32 %v542, %v693
    %v914 = vmul.f32 %v542, %v694
    %v915 = vmul.f32 %v542, %v695
    %v916 = vmul.f32 %v542, %v696
    %v917 = vmul.f32 %v542, %v697
    %v918 = vmul.f32 %v542, %v698
    %v919 = vmul.f32 %v542, %v699
    %v920 = vmul.f32 %v542, %v700
    %v921 = vmul.f32 %v542, %v701
    %v922 = vmul.f32 %v542, %v702
    %v923 = vmul.f32 %v542, %v703
    %v924 = vadd.f32 %v892, %v908
    %v925 = vadd.f32 %v893, %v909
    %v926 = vadd.f32 %v894, %v910
    %v927 = vadd.f32 %v895, %v911
    %v928 = vadd.f32 %v896, %v912
    %v929 = vadd.f32 %v897, %v913
    %v930 = vadd.f32 %v898, %v914
    %v931 = vadd.f32 %v899, %v915
    %v932 = vadd.f32 %v900, %v916
    %v933 = vadd.f32 %v901, %v917
    %v934 = vadd.f32 %v902, %v918
    %v935 = vadd.f32 %v903, %v919
    %v936 = vadd.f32 %v904, %v920
    %v937 = vadd.f32 %v905, %v921
    %v938 = vadd.f32 %v906, %v922
    %v939 = vadd.f32 %v907, %v923
    %v940 = vmul.f32 %v543, %v876
    %v941 = vmul.f32 %v543, %v877
    %v942 = vmul.f32 %v543, %v878
    %v943 = vmul.f32 %v543, %v879
    %v944 = vmul.f32 %v543, %v880
    %v945 = vmul.f32 %v543, %v881
    %v946 = vmul.f32 %v543, %v882
    %v947 = vmul.f32 %v543, %v883
    %v948 = vmul.f32 %v543, %v884
    %v949 = vmul.f32 %v543, %v885
    %v950 = vmul.f32 %v543, %v886
    %v951 = vmul.f32 %v543, %v887
    %v952 = vmul.f32 %v543, %v888
    %v953 = vmul.f32 %v543, %v889
    %v954 = vmul.f32 %v543, %v890
    %v955 = vmul.f32 %v543, %v891
    %v956 = vadd.f32 %v924, %v940
    %v957 = vadd.f32 %v925, %v941
    %v958 = vadd.f32 %v926, %v942
    %v959 = vadd.f32 %v927, %v943
    %v960 = vadd.f32 %v928, %v944
    %v961 = vadd.f32 %v929, %v945
    %v962 = vadd.f32 %v930, %v946
    %v963 = vadd.f32 %v931, %v947
    %v964 = vadd.f32 %v932, %v948
    %v965 = vadd.f32 %v933, %v949
    %v966 = vadd.f32 %v934, %v950
    %v967 = vadd.f32 %v935, %v951
    %v968 = vadd.f32 %v936, %v952
    %v969 = vadd.f32 %v937, %v953
    %v970 = vadd.f32 %v938, %v954
    %v971 = vadd.f32 %v939, %v955
    %v972 = vrcp.pop %v956
    %v973 = vmul.f32 1.0, %v972
    %v974 = vrcp.pop %v957
    %v975 = vmul.f32 1.0, %v974
    %v976 = vrcp.pop %v958
    %v977 = vmul.f32 1.0, %v976
    %v978 = vrcp.pop %v959
    %v979 = vmul.f32 1.0, %v978
    %v980 = vrcp.pop %v960
    %v981 = vmul.f32 1.0, %v980
    %v982 = vrcp.pop %v961
    %v983 = vmul.f32 1.0, %v982
    %v984 = vrcp.pop %v962
    %v985 = vmul.f32 1.0, %v984
    %v986 = vrcp.pop %v963
    %v987 = vmul.f32 1.0, %v986
    %v988 = vrcp.pop %v964
    %v989 = vmul.f32 1.0, %v988
    %v990 = vrcp.pop %v965
    %v991 = vmul.f32 1.0, %v990
    %v992 = vrcp.pop %v966
    %v993 = vmul.f32 1.0, %v992
    %v994 = vrcp.pop %v967
    %v995 = vmul.f32 1.0, %v994
    %v996 = vrcp.pop %v968
    %v997 = vmul.f32 1.0, %v996
    %v998 = vrcp.pop %v969
    %v999 = vmul.f32 1.0, %v998
    %v1000 = vrcp.pop %v970
    %v1001 = vmul.f32 1.0, %v1000
    %v1002 = vrcp.pop %v971
    %v1003 = vmul.f32 1.0, %v1002
    %v1004 = vmul.f32 %v104, %v973
    %v1005 = vmul.f32 %v105, %v975
    %v1006 = vmul.f32 %v106, %v977
    %v1007 = vmul.f32 %v107, %v979
    %v1008 = vmul.f32 %v108, %v981
    %v1009 = vmul.f32 %v109, %v983
    %v1010 = vmul.f32 %v110, %v985
    %v1011 = vmul.f32 %v111, %v987
    %v1012 = vmul.f32 %v112, %v989
    %v1013 = vmul.f32 %v113, %v991
    %v1014 = vmul.f32 %v114, %v993
    %v1015 = vmul.f32 %v115, %v995
    %v1016 = vmul.f32 %v116, %v997
    %v1017 = vmul.f32 %v117, %v999
    %v1018 = vmul.f32 %v118, %v1001
    %v1019 = vmul.f32 %v119, %v1003
    %1020 = vst.msk [vmem:[#allocation5] sm:$0xff] %vm39, %v1004
    %1021 = vst.msk [vmem:[#allocation5 + $0x8] sm:$0xff] %vm39, %v1005
    %1022 = vst.msk [vmem:[#allocation5 + $0x10] sm:$0xff] %vm39, %v1006
    %1023 = vst.msk [vmem:[#allocation5 + $0x18] sm:$0xff] %vm39, %v1007
    %1024 = vst.msk [vmem:[#allocation5 + $0x20] sm:$0xff] %vm39, %v1008
    %1025 = vst.msk [vmem:[#allocation5 + $0x28] sm:$0xff] %vm39, %v1009
    %1026 = vst.msk [vmem:[#allocation5 + $0x30] sm:$0xff] %vm39, %v1010
    %1027 = vst.msk [vmem:[#allocation5 + $0x38] sm:$0xff] %vm39, %v1011
    %1028 = vst.msk [vmem:[#allocation5 + $0x40] sm:$0xff] %vm39, %v1012
    %1029 = vst.msk [vmem:[#allocation5 + $0x48] sm:$0xff] %vm39, %v1013
    %1030 = vst.msk [vmem:[#allocation5 + $0x50] sm:$0xff] %vm39, %v1014
    %1031 = vst.msk [vmem:[#allocation5 + $0x58] sm:$0xff] %vm39, %v1015
    %1032 = vst.msk [vmem:[#allocation5 + $0x60] sm:$0xff] %vm39, %v1016
    %1033 = vst.msk [vmem:[#allocation5 + $0x68] sm:$0xff] %vm39, %v1017
    %1034 = vst.msk [vmem:[#allocation5 + $0x70] sm:$0xff] %vm39, %v1018
    %1035 = vst.msk [vmem:[#allocation5 + $0x78] sm:$0xff] %vm39, %v1019
    // Predicated region
    $region10: #{huber_layer_norm.1} parent=1 // pred_check
      _
    $region11: #{huber_layer_norm.1} parent=1 // pred_check_branch
      %1037 = sbr.rel (0) target = $region13
    $region12: #{huber_layer_norm.1} parent=1 // pred_region
      %s1039 = ssub.s32 2048, 2048
      %1040 = vsyncadd [#allocation4], %s1039
      %s1041 = sshll.u32 [#allocation5], 4
      %s1042 = int_to_ptr.vmem [resolvable:$true] %s1041
      %1047 = dma.vmem_to_hbm [thread:$0]  %s1042, 2048, %s1, [#allocation4], 128, 128, 8
    $region13: #{huber_layer_norm.1} parent=1 // pred_fallthru
      _
    // Predicated region
    $region14: #{huber_layer_norm.1} parent=1 // pred_check
      _
    $region15: #{huber_layer_norm.1} parent=1 // pred_check_branch
      %1049 = sbr.rel (0) target = $region17
    $region16: #{huber_layer_norm.1} parent=1 // pred_region
      %1050 = dma.done [#allocation4], 2048
    $region17: #{huber_layer_norm.1} parent=1 // pred_fallthru
      _
    %1051 = vsyncpa [#allocation3], 1
    %1052 = vsyncpa [#allocation4], 1

</llo_original>
